<compile_context>
chip_gen: v7x
topology: tpu7x:2x2x1
jax: 0.10.0
libtpu: 0.0.40
codegen_flags: <defaults>
</compile_context>

<pallas_src>
import functools

import jax
import jax.numpy as jnp
from jax.experimental import pallas as pl
from jax.experimental.pallas import tpu as pltpu


def _bn_relu_conv1x1_stats_kernel(x_ref, scale_ref, shift_ref, w_ref,
                                  y_ref, stats_ref):
    # x_ref:     (1, Cin, HW)    channel-major image
    # scale/shift: (Cin, 1)      folded BN1 (gamma/sqrt(var+eps), beta-mean*scale)
    # w_ref:     (Cmid, Cin)     conv1 weight (torch (out,in,1,1) squeezed)
    # y_ref:     (1, Cmid, HW)   conv1 output (lane-dense: HW lanes)
    # stats_ref: (1, Cmid, 2)    per-image [sum(y), sum(y*y)] per channel
    x = x_ref[0]                                                   # (Cin, HW)
    a = jnp.maximum(x * scale_ref[...] + shift_ref[...], 0.0)      # BN1 + ReLU
    y = jnp.dot(w_ref[...], a, preferred_element_type=jnp.float32) # (Cmid, HW)
    y_ref[0] = y
    s = jnp.sum(y, axis=1, keepdims=True)                          # (Cmid, 1)
    ss = jnp.sum(y * y, axis=1, keepdims=True)                     # (Cmid, 1)
    stats_ref[0] = jnp.concatenate([s, ss], axis=1)                # (Cmid, 2)


def _bn_relu_conv3x3_concat_kernel(y_ref, x_ref, scale_ref, shift_ref,
                                   mask_ref, w_ref, o_ref, *, H, W):
    # y_ref:   (1, Cmid, HW)     conv1 output
    # x_ref:   (1, Cin, HW)      skip connection (for fused concat)
    # scale/shift: (Cmid, 1)     folded BN2
    # mask_ref:(2, HW)           row0: 0 where w==0 else 1; row1: 0 where w==W-1
    # w_ref:   (3, G, 3*Cmid)    conv2 weight, per-dh, k = dw*Cmid + c
    # o_ref:   (1, G+Cin, HW)    [conv2_out ; skip] channel-major (lane-dense)
    Cmid = y_ref.shape[1]
    G = w_ref.shape[1]
    HW = H * W

    a = jnp.maximum(y_ref[0] * scale_ref[...] + shift_ref[...], 0.0)  # (Cmid, HW)

    # Flat-padded activation: az[:, PAD + p] == a[:, p]; pads cover the +-1 row
    # (dh) boundary automatically.  Column (dw) boundaries are fixed with masks.
    PAD = W + 1
    zpad = jnp.zeros((Cmid, PAD), jnp.float32)
    az = jnp.concatenate([zpad, a, zpad], axis=1)                  # (Cmid, HW+2*PAD)

    not_left = mask_ref[0:1, :]    # (1, HW): output col 0 may not read col -1
    not_right = mask_ref[1:2, :]   # (1, HW): output col W-1 may not read col W

    acc = jnp.zeros((G, HW), jnp.float32)
    for dh in range(3):                      # 3 matmuls, K = 3*Cmid each
        base = PAD + (dh - 1) * W
        t0 = az[:, base - 1: base - 1 + HW] * not_left    # dw = 0  (w-1)
        t1 = az[:, base: base + HW]                       # dw = 1  (w)
        t2 = az[:, base + 1: base + 1 + HW] * not_right   # dw = 2  (w+1)
        b = jnp.concatenate([t0, t1, t2], axis=0)         # (3*Cmid, HW)
        acc = acc + jnp.dot(w_ref[dh], b, preferred_element_type=jnp.float32)

    # Fused channel concat: [new_features, skip]  (matches torch.cat((x, skip)))
    o_ref[0] = jnp.concatenate([acc, x_ref[0]], axis=0)   # (G+Cin, HW)


def densenet_bottleneck(x_nchw, params, eps=1e-5):
    x = x_nchw.astype(jnp.float32)
    N, Cin, H, W = x.shape
    HW = H * W
    x2 = x.reshape(N, Cin, HW)                 # channel-major, lane axis = H*W

    w1 = params['w1'].astype(jnp.float32)      # (Cmid, Cin)
    w2 = params['w2'].astype(jnp.float32)      # (G, Cmid, 3, 3)
    Cmid = w1.shape[0]
    G = w2.shape[0]

    # --- BN1 batch statistics (biased variance) — tiny glue reduction over x ---
    mean1 = jnp.mean(x2, axis=(0, 2))
    var1 = jnp.var(x2, axis=(0, 2))
    scale1 = (params['gamma1'].astype(jnp.float32) / jnp.sqrt(var1 + eps))
    shift1 = params['beta1'].astype(jnp.float32) - mean1 * scale1

    y, stats = pl.pallas_call(
        _bn_relu_conv1x1_stats_kernel,
        out_shape=(jax.ShapeDtypeStruct((N, Cmid, HW), jnp.float32),
                   jax.ShapeDtypeStruct((N, Cmid, 2), jnp.float32)),
        grid=(N,),
        in_specs=[
            pl.BlockSpec((1, Cin, HW), lambda n: (n, 0, 0)),
            pl.BlockSpec((Cin, 1), lambda n: (0, 0)),
            pl.BlockSpec((Cin, 1), lambda n: (0, 0)),
            pl.BlockSpec((Cmid, Cin), lambda n: (0, 0)),
        ],
        out_specs=(pl.BlockSpec((1, Cmid, HW), lambda n: (n, 0, 0)),
                   pl.BlockSpec((1, Cmid, 2), lambda n: (n, 0, 0))),
        compiler_params=pltpu.CompilerParams(
            dimension_semantics=("parallel",)),
    )(x2, scale1.reshape(Cin, 1), shift1.reshape(Cin, 1), w1)

    # --- BN2 statistics from kernel-1 side outputs (no re-read of y) ---
    cnt = jnp.float32(N * HW)
    mean2 = jnp.sum(stats[:, :, 0], axis=0) / cnt
    var2 = jnp.maximum(jnp.sum(stats[:, :, 1], axis=0) / cnt - mean2 * mean2, 0.0)
    scale2 = (params['gamma2'].astype(jnp.float32) / jnp.sqrt(var2 + eps))
    shift2 = params['beta2'].astype(jnp.float32) - mean2 * scale2

    # conv2 weight (G, Cmid, 3, 3) -> (3[dh], G, 3*Cmid) with index dw*Cmid + c
    w2r = jnp.transpose(w2, (2, 0, 3, 1)).reshape(3, G, 3 * Cmid)

    # Column-boundary masks for the +-1 width taps (built once in the wrapper).
    col = jnp.arange(HW, dtype=jnp.int32) % W
    edge_mask = jnp.stack([(col != 0), (col != (W - 1))]).astype(jnp.float32)

    kernel2 = functools.partial(_bn_relu_conv3x3_concat_kernel, H=H, W=W)
    out2 = pl.pallas_call(
        kernel2,
        out_shape=jax.ShapeDtypeStruct((N, G + Cin, HW), jnp.float32),
        grid=(N,),
        in_specs=[
            pl.BlockSpec((1, Cmid, HW), lambda n: (n, 0, 0)),
            pl.BlockSpec((1, Cin, HW), lambda n: (n, 0, 0)),
            pl.BlockSpec((Cmid, 1), lambda n: (0, 0)),
            pl.BlockSpec((Cmid, 1), lambda n: (0, 0)),
            pl.BlockSpec((2, HW), lambda n: (0, 0)),
            pl.BlockSpec((3, G, 3 * Cmid), lambda n: (0, 0, 0)),
        ],
        out_specs=pl.BlockSpec((1, G + Cin, HW), lambda n: (n, 0, 0)),
        compiler_params=pltpu.CompilerParams(
            dimension_semantics=("parallel",)),
    )(y, x2, scale2.reshape(Cmid, 1), shift2.reshape(Cmid, 1), edge_mask, w2r)

    # Output is already channel-major NCHW — just unflatten the spatial axis.
    return out2.reshape(N, G + Cin, H, W)


def reference(x_nchw, params, eps=1e-5):
    """Pure-JAX f32 reference in NCHW for verification."""
    x = x_nchw.astype(jnp.float32)
    N, Cin, H, W = x.shape

    def bn(v, gamma, beta):
        mean = jnp.mean(v, axis=(0, 2, 3), keepdims=True)
        var = jnp.mean((v - mean) ** 2, axis=(0, 2, 3), keepdims=True)
        return ((v - mean) / jnp.sqrt(var + eps) * gamma.reshape(1, -1, 1, 1)
                + beta.reshape(1, -1, 1, 1))

    a = jnp.maximum(bn(x, params['gamma1'], params['beta1']), 0.0)
    y = jnp.einsum('nchw,mc->nmhw', a, params['w1'])
    b = jnp.maximum(bn(y, params['gamma2'], params['beta2']), 0.0)
    bp = jnp.pad(b, ((0, 0), (0, 0), (1, 1), (1, 1)))
    G = params['w2'].shape[0]
    z = jnp.zeros((N, G, H, W), jnp.float32)
    for dh in range(3):
        for dw in range(3):
            z = z + jnp.einsum('nchw,gc->nghw',
                               bp[:, :, dh:dh + H, dw:dw + W],
                               params['w2'][:, :, dh, dw])
    return jnp.concatenate([z, x], axis=1)


if __name__ == "__main__":
    key = jax.random.PRNGKey(0)
    N, Cin, H, W = 2, 16, 16, 16
    growth = 8
    Cmid = 4 * growth

    k_x, k_w1, k_w2, k_g1, k_b1, k_g2, k_b2 = jax.random.split(key, 7)
    x = jax.random.normal(k_x, (N, Cin, H, W), jnp.float32)
    params = {
        'gamma1': 1.0 + 0.1 * jax.random.normal(k_g1, (Cin,), jnp.float32),
        'beta1': 0.1 * jax.random.normal(k_b1, (Cin,), jnp.float32),
        'gamma2': 1.0 + 0.1 * jax.random.normal(k_g2, (Cmid,), jnp.float32),
        'beta2': 0.1 * jax.random.normal(k_b2, (Cmid,), jnp.float32),
        # conv1 weight: torch layout (4*growth, Cin, 1, 1) squeezed -> (Cmid, Cin)
        'w1': 0.1 * jax.random.normal(k_w1, (Cmid, Cin), jnp.float32),
        # conv2 weight: torch layout (growth, Cmid, 3, 3)
        'w2': 0.1 * jax.random.normal(k_w2, (growth, Cmid, 3, 3), jnp.float32),
    }
    # TODO(synk): BatchNorm running-stat (momentum) buffer updates are
    # training-state mutations and are not modeled in this pure forward pass.

    out = jax.block_until_ready(densenet_bottleneck(x, params))
    ref = reference(x, params)
    assert out.shape == (N, growth + Cin, H, W), out.shape
    err = float(jnp.max(jnp.abs(out - ref)))
    assert jnp.allclose(out, ref, atol=2e-3, rtol=2e-3), err
    print("KERNEL_OK")
</pallas_src>

<mosaic_0001>
module attributes {stable_mosaic.version = 11 : i64} {
  func.func @_bn_relu_conv1x1_stats_kernel(%arg0: i32, %arg1: memref<1x16x256xf32, #tpu.memory_space<vmem>>, %arg2: memref<16x1xf32, #tpu.memory_space<vmem>>, %arg3: memref<16x1xf32, #tpu.memory_space<vmem>>, %arg4: memref<32x16xf32, #tpu.memory_space<vmem>>, %arg5: memref<1x32x256xf32, #tpu.memory_space<vmem>>, %arg6: memref<1x32x2xf32, #tpu.memory_space<vmem>>) attributes {dimension_semantics = [#tpu.dimension_semantics<parallel>], iteration_bounds = array<i64: 2>, scalar_prefetch = 0 : i64, scratch_operands = 0 : i64, tpu.core_type = #tpu.core_type<tc>, window_params = [{transform_indices = @transform_0, window_bounds = array<i64: 1, 16, 256>}, {pipeline_mode = #tpu.pipeline_mode<synchronous>, transform_indices = @transform_1, window_bounds = array<i64: 16, 1>}, {pipeline_mode = #tpu.pipeline_mode<synchronous>, transform_indices = @transform_2, window_bounds = array<i64: 16, 1>}, {pipeline_mode = #tpu.pipeline_mode<synchronous>, transform_indices = @transform_3, window_bounds = array<i64: 32, 16>}, {transform_indices = @transform_4, window_bounds = array<i64: 1, 32, 256>}, {transform_indices = @transform_5, window_bounds = array<i64: 1, 32, 2>}]} {
    %c0 = arith.constant 0 : index
    %c0_0 = arith.constant 0 : index
    %c0_1 = arith.constant 0 : index
    %0 = vector.load %arg1[%c0, %c0_0, %c0_1] : memref<1x16x256xf32, #tpu.memory_space<vmem>>, vector<1x16x256xf32>
    %1 = vector.shape_cast %0 : vector<1x16x256xf32> to vector<16x256xf32>
    %c0_2 = arith.constant 0 : index
    %c0_3 = arith.constant 0 : index
    %2 = vector.load %arg2[%c0_2, %c0_3] : memref<16x1xf32, #tpu.memory_space<vmem>>, vector<16x1xf32>
    %3 = vector.broadcast %2 : vector<16x1xf32> to vector<16x256xf32>
    %4 = arith.mulf %1, %3 : vector<16x256xf32>
    %c0_4 = arith.constant 0 : index
    %c0_5 = arith.constant 0 : index
    %5 = vector.load %arg3[%c0_4, %c0_5] : memref<16x1xf32, #tpu.memory_space<vmem>>, vector<16x1xf32>
    %6 = vector.broadcast %5 : vector<16x1xf32> to vector<16x256xf32>
    %7 = arith.addf %4, %6 : vector<16x256xf32>
    %cst = arith.constant 0.000000e+00 : f32
    %8 = vector.broadcast %cst : f32 to vector<16x256xf32>
    %9 = arith.maximumf %7, %8 : vector<16x256xf32>
    %c0_6 = arith.constant 0 : index
    %c0_7 = arith.constant 0 : index
    %10 = vector.load %arg4[%c0_6, %c0_7] : memref<32x16xf32, #tpu.memory_space<vmem>>, vector<32x16xf32>
    %cst_8 = arith.constant dense<0.000000e+00> : vector<32x256xf32>
    %11 = tpu.matmul %10, %9, %cst_8 {dimension_numbers = #tpu.dot_dimension_numbers<[1], [0], [0], [1], [0, 0, 1, 1], [], []>} : vector<32x16xf32>, vector<16x256xf32>, vector<32x256xf32> -> vector<32x256xf32>
    %c0_9 = arith.constant 0 : index
    %c0_10 = arith.constant 0 : index
    %c0_11 = arith.constant 0 : index
    %12 = vector.load %arg5[%c0_9, %c0_10, %c0_11] : memref<1x32x256xf32, #tpu.memory_space<vmem>>, vector<1x32x256xf32>
    %13 = vector.shape_cast %12 : vector<1x32x256xf32> to vector<32x256xf32>
    %14 = vector.shape_cast %11 : vector<32x256xf32> to vector<1x32x256xf32>
    tpu.vector_store %arg5[%c0_9, %c0_10, %c0_11], %14 {strides = array<i32>} : memref<1x32x256xf32, #tpu.memory_space<vmem>>, vector<1x32x256xf32>,
    %cst_12 = arith.constant dense<0.000000e+00> : vector<32xf32>
    %15 = vector.multi_reduction <add>, %11, %cst_12 [1] : vector<32x256xf32> to vector<32xf32>
    %16 = vector.shape_cast %15 : vector<32xf32> to vector<32x1xf32>
    %17 = arith.mulf %11, %11 : vector<32x256xf32>
    %cst_13 = arith.constant dense<0.000000e+00> : vector<32xf32>
    %18 = vector.multi_reduction <add>, %17, %cst_13 [1] : vector<32x256xf32> to vector<32xf32>
    %19 = vector.shape_cast %18 : vector<32xf32> to vector<32x1xf32>
    %20 = tpu.concatenate %16, %19 in 1 : vector<32x1xf32>, vector<32x1xf32> -> vector<32x2xf32>
    %c0_14 = arith.constant 0 : index
    %c0_15 = arith.constant 0 : index
    %c0_16 = arith.constant 0 : index
    %21 = vector.load %arg6[%c0_14, %c0_15, %c0_16] : memref<1x32x2xf32, #tpu.memory_space<vmem>>, vector<1x32x2xf32>
    %22 = vector.shape_cast %21 : vector<1x32x2xf32> to vector<32x2xf32>
    %23 = vector.shape_cast %20 : vector<32x2xf32> to vector<1x32x2xf32>
    tpu.vector_store %arg6[%c0_14, %c0_15, %c0_16], %23 {strides = array<i32>} : memref<1x32x2xf32, #tpu.memory_space<vmem>>, vector<1x32x2xf32>,
    return
  }
  func.func @transform_0(%arg0: i32) -> (i32, i32, i32) {
    %c0_i32 = arith.constant 0 : i32
    %c0_i32_0 = arith.constant 0 : i32
    %c0_i32_1 = arith.constant 0 : i32
    return %arg0, %c0_i32, %c0_i32_0 : i32, i32, i32
  }
  func.func @transform_1(%arg0: i32) -> (i32, i32) {
    %c0_i32 = arith.constant 0 : i32
    %c0_i32_0 = arith.constant 0 : i32
    %c0_i32_1 = arith.constant 0 : i32
    return %c0_i32, %c0_i32_0 : i32, i32
  }
  func.func @transform_2(%arg0: i32) -> (i32, i32) {
    %c0_i32 = arith.constant 0 : i32
    %c0_i32_0 = arith.constant 0 : i32
    %c0_i32_1 = arith.constant 0 : i32
    return %c0_i32, %c0_i32_0 : i32, i32
  }
  func.func @transform_3(%arg0: i32) -> (i32, i32) {
    %c0_i32 = arith.constant 0 : i32
    %c0_i32_0 = arith.constant 0 : i32
    %c0_i32_1 = arith.constant 0 : i32
    return %c0_i32, %c0_i32_0 : i32, i32
  }
  func.func @transform_4(%arg0: i32) -> (i32, i32, i32) {
    %c0_i32 = arith.constant 0 : i32
    %c0_i32_0 = arith.constant 0 : i32
    %c0_i32_1 = arith.constant 0 : i32
    return %arg0, %c0_i32, %c0_i32_0 : i32, i32, i32
  }
  func.func @transform_5(%arg0: i32) -> (i32, i32, i32) {
    %c0_i32 = arith.constant 0 : i32
    %c0_i32_0 = arith.constant 0 : i32
    %c0_i32_1 = arith.constant 0 : i32
    return %arg0, %c0_i32, %c0_i32_0 : i32, i32, i32
  }
}

</mosaic_0001>

<llo_original>
// kernel: tpu_custom_call.1
$region0: #{tpu_custom_call.1}
  #allocation0 [shape = 'u32[]', space=smem, size = 0x4, offset = 0x4, fixed_abs, tag = 'smem constant byte address 0x4 - core index']
  #allocation1 [shape = 'u32[144,128]{1,0:T(1,128)}', space=vmem, size = 0x12000, scoped, tag = 'internal scratch']
  %s0 = inlined_call_operand.vmem [shape: f32[2,16,256], index: 0, kind: input, shape index: {}]
  %s1 = inlined_call_operand.vmem [shape: f32[16,1], index: 1, kind: input, shape index: {}]
  %s2 = inlined_call_operand.vmem [shape: f32[16,1], index: 2, kind: input, shape index: {}]
  %s3 = inlined_call_operand.vmem [shape: f32[32,16], index: 3, kind: input, shape index: {}]
  %s4 = inlined_call_operand.hbm [shape: f32[2,32,256], index: 4, kind: output, shape index: {0}]
  %s5 = inlined_call_operand.vmem [shape: f32[2,32,2], index: 5, kind: output, shape index: {1}]
  %6 = xla_tuple %s4, %s5
  %s7 = sld [smem:[#allocation0]]
  $region57: #{tpu_custom_call.1} parent=0
    _
  %s9 = ssub.s32 1, %s7
  %s10 = scalar_select 0, %s9, %s7
  $region1: #{tpu_custom_call.1} parent=0
    #allocation2 [shape = 'u8[65536]{0}', space=vmem, size = 0x10000, scoped, tag = 'output window, operand 0']
    #allocation3 [shape = 's32[2]{0}', space=sflag, size = 0x8, scoped, tag = 'scoped memory for tpu_custom_call.1']
    %11 = vsyncpa [#allocation3], 0
    %s12 = scalar_lea.sflag [#allocation3], 1
    %13 = vsyncpa %s12, 0
    loop: start=0, step=1, limit=4
    $region2: #{tpu_custom_call.1} parent=1 // loop_pre_header
      _
    $region3: #{tpu_custom_call.1} parent=1 // loop_header
      %s15 = sphi 0, %s19
      %p16 = scmp.ge.s32.totalorder %s15, 4
      %s25 = sphi 0, %s27
      %s28 = sphi 0, %s25
      %s29 = sphi 0, %s28
      %s45 = sphi 0, %s29
      %s49 = sphi 0, %s49
      %s51 = sphi 0, %s49
      %s52 = sphi 0, %s51
      %s66 = sphi 0, %s52
      %s70 = sphi 0, %s70
      %s72 = sphi 0, %s70
      %s73 = sphi 0, %s72
      %s87 = sphi 0, %s73
      %s91 = sphi 0, %s91
      %s93 = sphi 0, %s91
      %s94 = sphi 0, %s93
      %s108 = sphi 0, %s94
      %s114 = sphi 0, %s116
      %s117 = sphi 0, %s114
      %s118 = sphi 0, %s117
      %s134 = sphi 0, %s118
      %s140 = sphi 0, %s142
      %s143 = sphi 0, %s140
      %s144 = sphi 0, %s143
      %s160 = sphi 0, %s144
    $region4: #{tpu_custom_call.1} parent=1 // loop_header_branch
      %18 = sbr.rel (%p16) target = $region8
    $region5: #{tpu_custom_call.1} parent=1 // loop_body
      %s20 = ssub.s32 %s15, 1
      %s21 = ssub.s32 %s15, 2
      %s22 = sadd.s32 %s15, 1
      %s23 = ssub.s32 %s15, %s22
      %p24 = scmp.eq.s32.totalorder %s23, 0
      %s26 = sadd.s32 %s25, 1
      %s27 = scalar_select %p24, %s25, %s26
      %p30 = pneg %p24
      %p31 = scmp.eq.s32.totalorder %s15, 1
      %p32 = por %p30, %p31
      %p33 = scmp.ne.s32.totalorder %s25, %s28
      %p34 = scmp.eq.s32.totalorder %s15, 0
      %p35 = por %p33, %p34
      %p36 = scmp.ne.s32.totalorder %s25, %s28
      %p37 = scmp.eq.s32.totalorder %s20, 1
      %p38 = por %p36, %p37
      %p39 = scmp.ne.s32.totalorder %s28, %s29
      %p40 = scmp.eq.s32.totalorder %s20, 0
      %p41 = por %p39, %p40
      %p42 = scmp.ne.s32.totalorder %s28, %s29
      %p43 = scmp.eq.s32.totalorder %s21, 1
      %p44 = por %p42, %p43
      %p46 = scmp.ne.s32.totalorder %s29, %s45
      %p47 = scmp.eq.s32.totalorder %s21, 0
      %p48 = por %p46, %p47
      %s50 = sadd.s32 %s49, 1
      %p53 = scmp.eq.s32.totalorder %s15, 1
      %p54 = scmp.ne.s32.totalorder %s49, %s51
      %p55 = scmp.eq.s32.totalorder %s15, 0
      %p56 = por %p54, %p55
      %p57 = scmp.ne.s32.totalorder %s49, %s51
      %p58 = scmp.eq.s32.totalorder %s20, 1
      %p59 = por %p57, %p58
      %p60 = scmp.ne.s32.totalorder %s51, %s52
      %p61 = scmp.eq.s32.totalorder %s20, 0
      %p62 = por %p60, %p61
      %p63 = scmp.ne.s32.totalorder %s51, %s52
      %p64 = scmp.eq.s32.totalorder %s21, 1
      %p65 = por %p63, %p64
      %p67 = scmp.ne.s32.totalorder %s52, %s66
      %p68 = scmp.eq.s32.totalorder %s21, 0
      %p69 = por %p67, %p68
      %s71 = sadd.s32 %s70, 1
      %p74 = scmp.eq.s32.totalorder %s15, 1
      %p75 = scmp.ne.s32.totalorder %s70, %s72
      %p76 = scmp.eq.s32.totalorder %s15, 0
      %p77 = por %p75, %p76
      %p78 = scmp.ne.s32.totalorder %s70, %s72
      %p79 = scmp.eq.s32.totalorder %s20, 1
      %p80 = por %p78, %p79
      %p81 = scmp.ne.s32.totalorder %s72, %s73
      %p82 = scmp.eq.s32.totalorder %s20, 0
      %p83 = por %p81, %p82
      %p84 = scmp.ne.s32.totalorder %s72, %s73
      %p85 = scmp.eq.s32.totalorder %s21, 1
      %p86 = por %p84, %p85
      %p88 = scmp.ne.s32.totalorder %s73, %s87
      %p89 = scmp.eq.s32.totalorder %s21, 0
      %p90 = por %p88, %p89
      %s92 = sadd.s32 %s91, 1
      %p95 = scmp.eq.s32.totalorder %s15, 1
      %p96 = scmp.ne.s32.totalorder %s91, %s93
      %p97 = scmp.eq.s32.totalorder %s15, 0
      %p98 = por %p96, %p97
      %p99 = scmp.ne.s32.totalorder %s91, %s93
      %p100 = scmp.eq.s32.totalorder %s20, 1
      %p101 = por %p99, %p100
      %p102 = scmp.ne.s32.totalorder %s93, %s94
      %p103 = scmp.eq.s32.totalorder %s20, 0
      %p104 = por %p102, %p103
      %p105 = scmp.ne.s32.totalorder %s93, %s94
      %p106 = scmp.eq.s32.totalorder %s21, 1
      %p107 = por %p105, %p106
      %p109 = scmp.ne.s32.totalorder %s94, %s108
      %p110 = scmp.eq.s32.totalorder %s21, 0
      %p111 = por %p109, %p110
      %s112 = ssub.s32 %s15, %s22
      %p113 = scmp.eq.s32.totalorder %s112, 0
      %s115 = sadd.s32 %s114, 1
      %s116 = scalar_select %p113, %s114, %s115
      %p119 = pneg %p113
      %p120 = scmp.eq.s32.totalorder %s15, 1
      %p121 = por %p119, %p120
      %p122 = scmp.ne.s32.totalorder %s114, %s117
      %p123 = scmp.eq.s32.totalorder %s15, 0
      %p124 = por %p122, %p123
      %p125 = scmp.ne.s32.totalorder %s114, %s117
      %p126 = scmp.eq.s32.totalorder %s20, 1
      %p127 = por %p125, %p126
      %p128 = scmp.ne.s32.totalorder %s117, %s118
      %p129 = scmp.eq.s32.totalorder %s20, 0
      %p130 = por %p128, %p129
      %p131 = scmp.ne.s32.totalorder %s117, %s118
      %p132 = scmp.eq.s32.totalorder %s21, 1
      %p133 = por %p131, %p132
      %p135 = scmp.ne.s32.totalorder %s118, %s134
      %p136 = scmp.eq.s32.totalorder %s21, 0
      %p137 = por %p135, %p136
      %s138 = ssub.s32 %s15, %s22
      %p139 = scmp.eq.s32.totalorder %s138, 0
      %s141 = sadd.s32 %s140, 1
      %s142 = scalar_select %p139, %s140, %s141
      %p145 = pneg %p139
      %p146 = scmp.eq.s32.totalorder %s15, 1
      %p147 = por %p145, %p146
      %p148 = scmp.ne.s32.totalorder %s140, %s143
      %p149 = scmp.eq.s32.totalorder %s15, 0
      %p150 = por %p148, %p149
      %p151 = scmp.ne.s32.totalorder %s140, %s143
      %p152 = scmp.eq.s32.totalorder %s20, 1
      %p153 = por %p151, %p152
      %p154 = scmp.ne.s32.totalorder %s143, %s144
      %p155 = scmp.eq.s32.totalorder %s20, 0
      %p156 = por %p154, %p155
      %p157 = scmp.ne.s32.totalorder %s143, %s144
      %p158 = scmp.eq.s32.totalorder %s21, 1
      %p159 = por %p157, %p158
      %p161 = scmp.ne.s32.totalorder %s144, %s160
      %p162 = scmp.eq.s32.totalorder %s21, 0
      %p163 = por %p161, %p162
      %p164 = scmp.le.s32.totalorder 1, %s15
      %p165 = scmp.lt.s32.totalorder %s15, 3
      %p166 = pnand %p164, %p165
      %p167 = pneg %p166
      // Predicated region
      $region9: #{tpu_custom_call.1} parent=5 // pred_check
        _
      $region10: #{tpu_custom_call.1} parent=5 // pred_check_branch
        %169 = sbr.rel (%p166) target = $region12
      $region11: #{tpu_custom_call.1} parent=5 // pred_region
        %s170 = ssub.s32 %s15, 1
        // Predicated region
        $region13: #{tpu_custom_call.1} parent=11 // pred_check
          %p171 = pneg %p62
        $region14: #{tpu_custom_call.1} parent=11 // pred_check_branch
          %173 = sbr.rel (%p171) target = $region16
        $region15: #{tpu_custom_call.1} parent=11 // pred_region
          _
        $region16: #{tpu_custom_call.1} parent=11 // pred_fallthru
          _
        // Predicated region
        $region17: #{tpu_custom_call.1} parent=11 // pred_check
          %p174 = pneg %p83
        $region18: #{tpu_custom_call.1} parent=11 // pred_check_branch
          %176 = sbr.rel (%p174) target = $region20
        $region19: #{tpu_custom_call.1} parent=11 // pred_region
          _
        $region20: #{tpu_custom_call.1} parent=11 // pred_fallthru
          _
        // Predicated region
        $region21: #{tpu_custom_call.1} parent=11 // pred_check
          %p177 = pneg %p104
        $region22: #{tpu_custom_call.1} parent=11 // pred_check_branch
          %179 = sbr.rel (%p177) target = $region24
        $region23: #{tpu_custom_call.1} parent=11 // pred_region
          _
        $region24: #{tpu_custom_call.1} parent=11 // pred_fallthru
          _
      $region12: #{tpu_custom_call.1} parent=5 // pred_fallthru
        _
      %p180 = scmp.lt.s32.totalorder %s15, 2
      // Predicated region
      $region25: #{tpu_custom_call.1} parent=5 // pred_check
        %p181 = pneg %p180
      $region26: #{tpu_custom_call.1} parent=5 // pred_check_branch
        %183 = sbr.rel (%p181) target = $region28
      $region27: #{tpu_custom_call.1} parent=5 // pred_region
        // Predicated region
        $region29: #{tpu_custom_call.1} parent=27 // pred_check
          %p184 = pneg %p35
        $region30: #{tpu_custom_call.1} parent=27 // pred_check_branch
          %186 = sbr.rel (%p184) target = $region32
        $region31: #{tpu_custom_call.1} parent=27 // pred_region
          %p187 = scmp.lt.s32.totalorder %s15, 1
          %s188 = scalar_select %p187, %s15, 1
          %s189 = smul.addr %s188, 4
          %s190 = smul.addr %s189, 8
          %s191 = scalar_lea.vmem %s0, %s190
        $region32: #{tpu_custom_call.1} parent=27 // pred_fallthru
          _
      $region28: #{tpu_custom_call.1} parent=5 // pred_fallthru
        _
      %p192 = scmp.le.s32.totalorder 1, %s15
      %p193 = scmp.lt.s32.totalorder %s15, 3
      %p194 = pnand %p192, %p193
      %p195 = pneg %p194
      // Predicated region
      $region33: #{tpu_custom_call.1} parent=5 // pred_check
        _
      $region34: #{tpu_custom_call.1} parent=5 // pred_check_branch
        %197 = sbr.rel (%p194) target = $region36
      $region35: #{tpu_custom_call.1} parent=5 // pred_region
        %s198 = ssub.s32 %s15, 1
        %p199 = scmp.lt.s32.totalorder %s20, 1
        %s200 = scalar_select %p199, %s20, 1
        %s201 = smul.addr %s200, 4
        %s202 = smul.addr %s201, 8
        %s203 = scalar_lea.vmem %s0, %s202
        %p204 = pneg %p41
        %p205 = pneg %p38
        %p206 = pneg %p62
        %p207 = pneg %p59
        %p208 = pneg %p83
        %p209 = pneg %p80
        %p210 = pneg %p104
        %p211 = pneg %p101
        %p212 = pneg %p130
        %p213 = pneg %p127
        %s214 = sand.u32 %s117, 1
        %s215 = scalar_lea.sflag [#allocation3], %s214
        %s216 = sand.u32 %s117, 1
        %s217 = smul.addr %s216, 64
        %s218 = scalar_lea.vmem [#allocation2], %s217
        %p219 = pneg %p156
        %p220 = pneg %p153
        %p221 = scmp.lt.s32.totalorder %s20, 1
        %s222 = scalar_select %p221, %s20, 1
        %s223 = smul.addr %s222, 4
        %s224 = smul.addr %s223, 8
        %s225 = scalar_lea.vmem %s5, %s224
        %p226 = scmp.lt.s32.totalorder %s20, 1
        %s227 = scalar_select %p226, %s20, 1
        %s228 = smul.addr %s227, 4
        %s229 = smul.addr %s228, 8
        %s230 = scalar_lea.vmem %s0, %s229
        %p231 = scmp.lt.s32.totalorder %s20, 1
        %s232 = scalar_select %p231, %s20, 1
        %s233 = smul.addr %s232, 4
        %s234 = smul.addr %s233, 8
        %s235 = scalar_lea.vmem %s5, %s234
        %v236 = vld [vmem:[%s230] sm:$0xff]
        %v237 = vld [vmem:[%s230 + $0x8] sm:$0xff]
        %v238 = vld [vmem:[%s230 + $0x10] sm:$0xff]
        %v239 = vld [vmem:[%s230 + $0x18] sm:$0xff]
        %v240 = vld [vmem:[%s1] sm:$0xff]
        %v241 = vld [vmem:[%s1 + $0x8] sm:$0xff]
        %243 = vset.pattern.permute.xlu0 0
        %244 = vperm.xlu0 %243, %v240
        %v245 = vpop.permute.xlu0 %244
        %248 = vset.pattern.permute.xlu0 0
        %249 = vperm.xlu0 %248, %v241
        %v250 = vpop.permute.xlu0 %249
        %v252 = vmul.f32 %v236, %v245
        %v253 = vmul.f32 %v237, %v245
        %v254 = vmul.f32 %v238, %v250
        %v255 = vmul.f32 %v239, %v250
        %v256 = vld [vmem:[%s2] sm:$0xff]
        %v257 = vld [vmem:[%s2 + $0x8] sm:$0xff]
        %259 = vset.pattern.permute.xlu0 0
        %260 = vperm.xlu0 %259, %v256
        %v261 = vpop.permute.xlu0 %260
        %264 = vset.pattern.permute.xlu0 0
        %265 = vperm.xlu0 %264, %v257
        %v266 = vpop.permute.xlu0 %265
        %v268 = vadd.f32 %v252, %v261
        %v269 = vadd.f32 %v253, %v261
        %v270 = vadd.f32 %v254, %v266
        %v271 = vadd.f32 %v255, %v266
        %v272 = vmax.f32 %v268, 0.0
        %v273 = vmax.f32 %v269, 0.0
        %v274 = vmax.f32 %v270, 0.0
        %v275 = vmax.f32 %v271, 0.0
        %v276 = vld [vmem:[%s3] sm:$0xff]
        %v277 = vld [vmem:[%s3 + $0x8] sm:$0xff]
        %v278 = vld [vmem:[%s3 + $0x10] sm:$0xff]
        %v279 = vld [vmem:[%s3 + $0x18] sm:$0xff]
        %vm280 = vcmask 130048
        %v282 = vsel %vm280, %v276, 0
        %v285 = vsel %vm280, %v277, 0
        %v288 = vsel %vm280, %v278, 0
        %v291 = vsel %vm280, %v279, 0
        %293 = vmatprep.subr.mxu0 %v273
        %294 = vmatpush1.msra.mxu0 %v272
        %295 = vmatprep.subr.mxu0 %v275
        %296 = vmatpush1.msra.mxu0 %v274
        %297 = vmatprep.subr.mxu0 0.0
        %298 = vmatpush1.msra.mxu0 0.0
        %299 = vmatprep.subr.mxu0 0.0
        %300 = vmatpush1.msra.mxu0 0.0
        %301 = vmatprep.subr.mxu0 0.0
        %302 = vmatpush1.msra.mxu0 0.0
        %303 = vmatprep.subr.mxu0 0.0
        %304 = vmatpush1.msra.mxu0 0.0
        %305 = vmatprep.subr.mxu0 0.0
        %306 = vmatpush1.msra.mxu0 0.0
        %307 = vmatprep.subr.mxu0 0.0
        %308 = vmatpush1.msra.mxu0 0.0
        %309 = vmatprep.subr.mxu0 0.0
        %310 = vmatpush1.msra.mxu0 0.0
        %311 = vmatprep.subr.mxu0 0.0
        %312 = vmatpush1.msra.mxu0 0.0
        %313 = vmatprep.subr.mxu0 0.0
        %314 = vmatpush1.msra.mxu0 0.0
        %315 = vmatprep.subr.mxu0 0.0
        %316 = vmatpush1.msra.mxu0 0.0
        %317 = vmatprep.subr.mxu0 0.0
        %318 = vmatpush1.msra.mxu0 0.0
        %319 = vmatprep.subr.mxu0 0.0
        %320 = vmatpush1.msra.mxu0 0.0
        %321 = vmatprep.subr.mxu0 0.0
        %322 = vmatpush1.msra.mxu0 0.0
        %323 = vmatprep.subr.mxu0 0.0
        %324 = vmatpush1.msra.mxu0 0.0
        %325 = vmatprep.subr.mxu0 0.0
        %326 = vmatpush1.msra.mxu0 0.0
        %327 = vmatprep.subr.mxu0 0.0
        %328 = vmatpush1.msra.mxu0 0.0
        %329 = vmatprep.subr.mxu0 0.0
        %330 = vmatpush1.msra.mxu0 0.0
        %331 = vmatprep.subr.mxu0 0.0
        %332 = vmatpush1.msra.mxu0 0.0
        %333 = vmatprep.subr.mxu0 0.0
        %334 = vmatpush1.msra.mxu0 0.0
        %335 = vmatprep.subr.mxu0 0.0
        %336 = vmatpush1.msra.mxu0 0.0
        %337 = vmatprep.subr.mxu0 0.0
        %338 = vmatpush1.msra.mxu0 0.0
        %339 = vmatprep.subr.mxu0 0.0
        %340 = vmatpush1.msra.mxu0 0.0
        %341 = vmatprep.subr.mxu0 0.0
        %342 = vmatpush1.msra.mxu0 0.0
        %343 = vmatprep.subr.mxu0 0.0
        %344 = vmatpush1.msra.mxu0 0.0
        %345 = vmatprep.subr.mxu0 0.0
        %346 = vmatpush1.msra.mxu0 0.0
        %347 = vmatprep.subr.mxu0 0.0
        %348 = vmatpush1.msra.mxu0 0.0
        %349 = vmatprep.subr.mxu0 0.0
        %350 = vmatpush1.msra.mxu0 0.0
        %351 = vmatprep.subr.mxu0 0.0
        %352 = vmatpush1.msra.mxu0 0.0
        %353 = vmatprep.subr.mxu0 0.0
        %354 = vmatpush1.msra.mxu0 0.0
        %355 = vmatprep.subr.mxu0 0.0
        %356 = vmatpush1.msra.mxu0 0.0
        %357 = vmatprep.mubr.f32.mxu0 0.0
        %358 = vmatmul.mubr.f32.gmra.mrb[0].mxu0 %v282
        %v359 = vpop.f32.mrb[0].mxu0
        %v360 = vadd.f32 0.0, %v359
        %v361 = vpop.f32.mrb[0].mxu0
        %v362 = vadd.f32 0.0, %v361
        %363 = vmatprep.mubr.f32.mxu0 0.0
        %364 = vmatmul.mubr.f32.gmra.mrb[0].mxu0 %v285
        %v365 = vpop.f32.mrb[0].mxu0
        %v366 = vadd.f32 0.0, %v365
        %v367 = vpop.f32.mrb[0].mxu0
        %v368 = vadd.f32 0.0, %v367
        %369 = vmatprep.mubr.f32.mxu0 0.0
        %370 = vmatmul.mubr.f32.gmra.mrb[0].mxu0 %v288
        %v371 = vpop.f32.mrb[0].mxu0
        %v372 = vadd.f32 0.0, %v371
        %v373 = vpop.f32.mrb[0].mxu0
        %v374 = vadd.f32 0.0, %v373
        %375 = vmatprep.mubr.f32.mxu0 0.0
        %376 = vmatmul.mubr.f32.gmra.mrb[0].mxu0 %v291
        %v377 = vpop.f32.mrb[0].mxu0
        %v378 = vadd.f32 0.0, %v377
        %v379 = vpop.f32.mrb[0].mxu0
        %v380 = vadd.f32 0.0, %v379
        %381 = vdwg.mxu0
        %382 = vst [vmem:[%s218] sm:$0xff] %v360
        %383 = vst [vmem:[%s218 + $0x8] sm:$0xff] %v362
        %384 = vst [vmem:[%s218 + $0x10] sm:$0xff] %v366
        %385 = vst [vmem:[%s218 + $0x18] sm:$0xff] %v368
        %386 = vst [vmem:[%s218 + $0x20] sm:$0xff] %v372
        %387 = vst [vmem:[%s218 + $0x28] sm:$0xff] %v374
        %388 = vst [vmem:[%s218 + $0x30] sm:$0xff] %v378
        %389 = vst [vmem:[%s218 + $0x38] sm:$0xff] %v380
        %v390 = vadd.f32 %v360, %v362
        %391 = vadd.xlane.f32.xlu0 %v390
        %v392 = vpop.xlane.xlu0 %391
        %v393 = vadd.f32 %v366, %v368
        %394 = vadd.xlane.f32.xlu0 %v393
        %v395 = vpop.xlane.xlu0 %394
        %v396 = vadd.f32 %v372, %v374
        %397 = vadd.xlane.f32.xlu0 %v396
        %v398 = vpop.xlane.xlu0 %397
        %v399 = vadd.f32 %v378, %v380
        %400 = vadd.xlane.f32.xlu0 %v399
        %v401 = vpop.xlane.xlu0 %400
        %v402 = vmul.f32 %v360, %v360
        %v403 = vmul.f32 %v362, %v362
        %v404 = vmul.f32 %v366, %v366
        %v405 = vmul.f32 %v368, %v368
        %v406 = vmul.f32 %v372, %v372
        %v407 = vmul.f32 %v374, %v374
        %v408 = vmul.f32 %v378, %v378
        %v409 = vmul.f32 %v380, %v380
        %v410 = vadd.f32 %v402, %v403
        %411 = vadd.xlane.f32.xlu0 %v410
        %v412 = vpop.xlane.xlu0 %411
        %v413 = vadd.f32 %v404, %v405
        %414 = vadd.xlane.f32.xlu0 %v413
        %v415 = vpop.xlane.xlu0 %414
        %v416 = vadd.f32 %v406, %v407
        %417 = vadd.xlane.f32.xlu0 %v416
        %v418 = vpop.xlane.xlu0 %417
        %v419 = vadd.f32 %v408, %v409
        %420 = vadd.xlane.f32.xlu0 %v419
        %v421 = vpop.xlane.xlu0 %420
        %vm422 = vcmask 7168
        %v423 = vsel %vm422, %v392, %v412
        %v424 = vsel %vm422, %v395, %v415
        %v425 = vsel %vm422, %v398, %v418
        %v426 = vsel %vm422, %v401, %v421
        %vm427 = vcmask 15360
        %428 = vst.msk [vmem:[%s235] sm:$0xff] %vm427, %v423
        %429 = vst.msk [vmem:[%s235 + $0x8] sm:$0xff] %vm427, %v424
        %430 = vst.msk [vmem:[%s235 + $0x10] sm:$0xff] %vm427, %v425
        %431 = vst.msk [vmem:[%s235 + $0x18] sm:$0xff] %vm427, %v426
        %s432 = sand.u32 %s117, 1
        %s433 = scalar_lea.sflag [#allocation3], %s432
        %s434 = sand.u32 %s117, 1
        %s435 = smul.addr %s434, 64
        %s436 = scalar_lea.vmem [#allocation2], %s435
        %p437 = scmp.lt.s32.totalorder %s20, 1
        %s438 = scalar_select %p437, %s20, 1
        %s439 = smul.addr %s438, 4
        %s440 = smul.addr %s439, 8
        %s441 = scalar_lea.vmem %s5, %s440
        // Predicated region
        $region37: #{tpu_custom_call.1} parent=35 // pred_check
          %p442 = pneg %p127
        $region38: #{tpu_custom_call.1} parent=35 // pred_check_branch
          %444 = sbr.rel (%p442) target = $region40
        $region39: #{tpu_custom_call.1} parent=35 // pred_region
          %s446 = ssub.s32 1024, 1024
          %447 = vsyncadd %s433, %s446
          %s448 = smul.addr %s20, 8
          %s449 = smul.addr %s448, 128
          %s450 = scalar_lea.hbm %s4, %s449
          %s451 = sshll.u32 %s436, 4
          %s452 = int_to_ptr.vmem [resolvable:$true] %s451
          %457 = dma.vmem_to_hbm [thread:$0]  %s452, 1024, %s450, %s433, 256, 256, 16
        $region40: #{tpu_custom_call.1} parent=35 // pred_fallthru
          _
        // Predicated region
        $region41: #{tpu_custom_call.1} parent=35 // pred_check
          %p458 = pneg %p153
        $region42: #{tpu_custom_call.1} parent=35 // pred_check_branch
          %460 = sbr.rel (%p458) target = $region44
        $region43: #{tpu_custom_call.1} parent=35 // pred_region
          _
        $region44: #{tpu_custom_call.1} parent=35 // pred_fallthru
          _
      $region36: #{tpu_custom_call.1} parent=5 // pred_fallthru
        _
      %p461 = scmp.le.s32.totalorder 2, %s15
      // Predicated region
      $region45: #{tpu_custom_call.1} parent=5 // pred_check
        %p462 = pneg %p461
      $region46: #{tpu_custom_call.1} parent=5 // pred_check_branch
        %464 = sbr.rel (%p462) target = $region48
      $region47: #{tpu_custom_call.1} parent=5 // pred_region
        %s465 = ssub.s32 %s15, 2
        // Predicated region
        $region49: #{tpu_custom_call.1} parent=47 // pred_check
          %p466 = pneg %p133
        $region50: #{tpu_custom_call.1} parent=47 // pred_check_branch
          %468 = sbr.rel (%p466) target = $region52
        $region51: #{tpu_custom_call.1} parent=47 // pred_region
          %s469 = sand.u32 %s118, 1
          %s470 = scalar_lea.sflag [#allocation3], %s469
          %s471 = sand.u32 %s118, 1
          %s472 = smul.addr %s471, 64
          %s473 = scalar_lea.vmem [#allocation2], %s472
          %474 = dma.done %s470, 1024
        $region52: #{tpu_custom_call.1} parent=47 // pred_fallthru
          _
        // Predicated region
        $region53: #{tpu_custom_call.1} parent=47 // pred_check
          %p475 = pneg %p159
        $region54: #{tpu_custom_call.1} parent=47 // pred_check_branch
          %477 = sbr.rel (%p475) target = $region56
        $region55: #{tpu_custom_call.1} parent=47 // pred_region
          %p478 = scmp.lt.s32.totalorder %s21, 1
          %s479 = scalar_select %p478, %s21, 1
          %s480 = smul.addr %s479, 4
          %s481 = smul.addr %s480, 8
          %s482 = scalar_lea.vmem %s5, %s481
        $region56: #{tpu_custom_call.1} parent=47 // pred_fallthru
          _
      $region48: #{tpu_custom_call.1} parent=5 // pred_fallthru
        _
    $region6: #{tpu_custom_call.1} parent=1 // loop_footer
      %s19 = sadd.s32 1, %s15
    $region7: #{tpu_custom_call.1} parent=1 // loop_footer_branch
      %14 = sbr.rel target = $region3
    $region8: #{tpu_custom_call.1} parent=1 // loop_exit
      _
    %483 = vsyncpa [#allocation3], 1
    %s484 = scalar_lea.sflag [#allocation3], 1
    %485 = vsyncpa %s484, 1

</llo_original>
